<compile_context>
chip_gen: v7x
topology: tpu7x:2x2x1
jax: 0.10.0
libtpu: 0.0.40
codegen_flags: <defaults>
</compile_context>

<pallas_src>
import functools

import jax
import jax.numpy as jnp
from jax.experimental import pallas as pl
from jax.experimental.pallas import tpu as pltpu

LANES = 128
SUBLANES = 8
MAX_TILE_ROWS = 1024  # (1024, 128) f32 = 512 KiB per operand tile


def _pow(v, g):
    # static exponent; gamma == 2 stays on the VPU as a single multiply
    if g == 2:
        return v * v
    if g == 1:
        return v
    return v ** g


def _focal_loss_kernel(x_ref, t_ref, out_ref, *, alpha, gamma,
                       valid, tile_elems, needs_mask):
    # x_ref / t_ref: (tile_rows, 128) lane-dense tiles (native dtype)
    # out_ref:       (1, 1, 128) per-lane partial sums for this tile
    x = x_ref[...].astype(jnp.float32)
    t = t_ref[...].astype(jnp.float32)

    # numerically stable log-sigmoid pair (EUP exp/log; VPU for the rest)
    neg_abs = -jnp.abs(x)
    log1p_term = jnp.log(1.0 + jnp.exp(neg_abs))
    log_p = jnp.minimum(x, 0.0) - log1p_term        # log(sigmoid(x))
    log_1mp = jnp.minimum(-x, 0.0) - log1p_term     # log(1 - sigmoid(x))
    p = jnp.exp(log_p)                              # sigmoid(x)

    alpha_mask = alpha * t
    loss_pos = -_pow(1.0 - p, gamma) * log_p * t * alpha_mask
    loss_neg = -_pow(p, gamma) * log_1mp * (1.0 - t) * (1.0 - alpha_mask)
    loss = loss_pos + loss_neg

    if needs_mask:
        # zero out flat-padding elements (all-static shapes -> constants)
        rows, lanes = loss.shape
        row = jax.lax.broadcasted_iota(jnp.int32, (rows, lanes), 0)
        lane = jax.lax.broadcasted_iota(jnp.int32, (rows, lanes), 1)
        gidx = pl.program_id(0) * tile_elems + row * lanes + lane
        loss = jnp.where(gidx < valid, loss, 0.0)

    # rows-only (sublane) reduction; keep 128 live lanes for the store
    partial = jnp.sum(loss, axis=0, keepdims=True)       # (1, 128)
    out_ref[...] = partial.reshape(out_ref.shape)          # unmasked full vst


def focal_loss_sigmoid(inputs, targets, *, alpha=0.25, gamma=2,
                       size_average=False):
    """Sigmoid focal loss matching PyTorch FocalLossSigmoid.forward."""
    assert inputs.shape == targets.shape
    total = int(inputs.size)

    # flatten (contiguous, free) and view as lane-dense (rows, 128) tiles
    flat_x = inputs.reshape(-1)
    flat_t = targets.reshape(-1)

    rows_needed = -(-total // LANES)
    rows_needed = max(SUBLANES, -(-rows_needed // SUBLANES) * SUBLANES)
    tile_rows = min(MAX_TILE_ROWS, rows_needed)
    num_tiles = -(-rows_needed // tile_rows)
    padded_rows = num_tiles * tile_rows
    padded_total = padded_rows * LANES

    needs_mask = padded_total != total
    if needs_mask:
        pad = padded_total - total
        flat_x = jnp.pad(flat_x, (0, pad))
        flat_t = jnp.pad(flat_t, (0, pad))

    x2 = flat_x.reshape(padded_rows, LANES)              # native-dtype DMA
    t2 = flat_t.reshape(padded_rows, LANES)

    kernel = functools.partial(
        _focal_loss_kernel,
        alpha=float(alpha), gamma=gamma,
        valid=total, tile_elems=tile_rows * LANES, needs_mask=needs_mask)

    partials = pl.pallas_call(
        kernel,
        out_shape=jax.ShapeDtypeStruct((num_tiles, 1, LANES), jnp.float32),
        grid=(num_tiles,),
        in_specs=[pl.BlockSpec((tile_rows, LANES), lambda i: (i, 0)),
                  pl.BlockSpec((tile_rows, LANES), lambda i: (i, 0))],
        out_specs=pl.BlockSpec((1, 1, LANES), lambda i: (i, 0, 0)),
        compiler_params=pltpu.CompilerParams(
            dimension_semantics=("parallel",)),          # megacore-friendly
    )(x2, t2)

    loss = jnp.sum(partials)                              # tiny cross-tile sum
    if size_average:
        loss = loss / float(total)
    return loss


# pure-JAX reference (mirrors the PyTorch forward exactly)
def _focal_loss_ref(inputs, targets, alpha=0.25, gamma=2, size_average=False):
    x = inputs.astype(jnp.float32)
    t = targets.astype(jnp.float32)
    p = jax.nn.sigmoid(x)
    alpha_mask = alpha * t
    loss_pos = -1.0 * ((1.0 - p) ** gamma) * jnp.log(p) * t * alpha_mask
    loss_neg = -1.0 * (p ** gamma) * jnp.log(1.0 - p) * (1.0 - t) * (1.0 - alpha_mask)
    batch_loss = loss_neg + loss_pos
    return batch_loss.mean() if size_average else batch_loss.sum()


if __name__ == "__main__":
    key = jax.random.PRNGKey(0)
    k1, k2 = jax.random.split(key)

    # SSD-style usage: (num_samples, num_classes) logits with one-hot targets
    N, C = 256, 8
    inputs = jax.random.normal(k1, (N, C), jnp.float32)
    labels = jax.random.randint(k2, (N,), 0, C)
    targets = jax.nn.one_hot(labels, C, dtype=jnp.float32)

    loss = jax.jit(focal_loss_sigmoid)(inputs, targets)
    jax.block_until_ready(loss)

    ref = _focal_loss_ref(inputs, targets)
    assert jnp.isfinite(loss), "non-finite loss"
    assert jnp.allclose(loss, ref, rtol=2e-3, atol=1e-3), (loss, ref)
    print("KERNEL_OK")
</pallas_src>

<mosaic_0001>
module attributes {stable_mosaic.version = 11 : i64} {
  func.func @_focal_loss_kernel(%arg0: i32, %arg1: memref<16x128xf32, #tpu.memory_space<vmem>>, %arg2: memref<16x128xf32, #tpu.memory_space<vmem>>, %arg3: memref<1x1x128xf32, #tpu.memory_space<vmem>>) attributes {dimension_semantics = [#tpu.dimension_semantics<parallel>], iteration_bounds = array<i64: 1>, scalar_prefetch = 0 : i64, scratch_operands = 0 : i64, tpu.core_type = #tpu.core_type<tc>, window_params = [{transform_indices = @transform_0, window_bounds = array<i64: 16, 128>}, {transform_indices = @transform_1, window_bounds = array<i64: 16, 128>}, {transform_indices = @transform_2, window_bounds = array<i64: 1, 1, 128>}]} {
    %c0 = arith.constant 0 : index
    %c0_0 = arith.constant 0 : index
    %0 = vector.load %arg1[%c0, %c0_0] : memref<16x128xf32, #tpu.memory_space<vmem>>, vector<16x128xf32>
    %c0_1 = arith.constant 0 : index
    %c0_2 = arith.constant 0 : index
    %1 = vector.load %arg2[%c0_1, %c0_2] : memref<16x128xf32, #tpu.memory_space<vmem>>, vector<16x128xf32>
    %2 = math.absf %0 : vector<16x128xf32>
    %cst = arith.constant 0.000000e+00 : f32
    %3 = vector.broadcast %cst : f32 to vector<16x128xf32>
    %4 = arith.subf %3, %2 : vector<16x128xf32>
    %5 = math.exp %4 : vector<16x128xf32>
    %cst_3 = arith.constant 1.000000e+00 : f32
    %6 = vector.broadcast %cst_3 : f32 to vector<16x128xf32>
    %7 = arith.addf %6, %5 : vector<16x128xf32>
    %8 = math.log %7 : vector<16x128xf32>
    %cst_4 = arith.constant 0.000000e+00 : f32
    %9 = vector.broadcast %cst_4 : f32 to vector<16x128xf32>
    %10 = arith.minimumf %0, %9 : vector<16x128xf32>
    %11 = arith.subf %10, %8 : vector<16x128xf32>
    %cst_5 = arith.constant 0.000000e+00 : f32
    %12 = vector.broadcast %cst_5 : f32 to vector<16x128xf32>
    %13 = arith.subf %12, %0 : vector<16x128xf32>
    %cst_6 = arith.constant 0.000000e+00 : f32
    %14 = vector.broadcast %cst_6 : f32 to vector<16x128xf32>
    %15 = arith.minimumf %13, %14 : vector<16x128xf32>
    %16 = arith.subf %15, %8 : vector<16x128xf32>
    %17 = math.exp %11 : vector<16x128xf32>
    %cst_7 = arith.constant 2.500000e-01 : f32
    %18 = vector.broadcast %cst_7 : f32 to vector<16x128xf32>
    %19 = arith.mulf %18, %1 : vector<16x128xf32>
    %cst_8 = arith.constant 1.000000e+00 : f32
    %20 = vector.broadcast %cst_8 : f32 to vector<16x128xf32>
    %21 = arith.subf %20, %17 : vector<16x128xf32>
    %22 = arith.mulf %21, %21 : vector<16x128xf32>
    %cst_9 = arith.constant 0.000000e+00 : f32
    %23 = vector.broadcast %cst_9 : f32 to vector<16x128xf32>
    %24 = arith.subf %23, %22 : vector<16x128xf32>
    %25 = arith.mulf %24, %11 : vector<16x128xf32>
    %26 = arith.mulf %25, %1 : vector<16x128xf32>
    %27 = arith.mulf %26, %19 : vector<16x128xf32>
    %28 = arith.mulf %17, %17 : vector<16x128xf32>
    %cst_10 = arith.constant 0.000000e+00 : f32
    %29 = vector.broadcast %cst_10 : f32 to vector<16x128xf32>
    %30 = arith.subf %29, %28 : vector<16x128xf32>
    %31 = arith.mulf %30, %16 : vector<16x128xf32>
    %cst_11 = arith.constant 1.000000e+00 : f32
    %32 = vector.broadcast %cst_11 : f32 to vector<16x128xf32>
    %33 = arith.subf %32, %1 : vector<16x128xf32>
    %34 = arith.mulf %31, %33 : vector<16x128xf32>
    %cst_12 = arith.constant 1.000000e+00 : f32
    %35 = vector.broadcast %cst_12 : f32 to vector<16x128xf32>
    %36 = arith.subf %35, %19 : vector<16x128xf32>
    %37 = arith.mulf %34, %36 : vector<16x128xf32>
    %38 = arith.addf %27, %37 : vector<16x128xf32>
    %cst_13 = arith.constant dense<0.000000e+00> : vector<128xf32>
    %39 = vector.multi_reduction <add>, %38, %cst_13 [0] : vector<16x128xf32> to vector<128xf32>
    %40 = vector.shape_cast %39 : vector<128xf32> to vector<1x128xf32>
    %41 = vector.shape_cast %40 : vector<1x128xf32> to vector<1x1x128xf32>
    %c0_14 = arith.constant 0 : index
    %c0_15 = arith.constant 0 : index
    %c0_16 = arith.constant 0 : index
    %42 = vector.load %arg3[%c0_14, %c0_15, %c0_16] : memref<1x1x128xf32, #tpu.memory_space<vmem>>, vector<1x1x128xf32>
    tpu.vector_store %arg3[%c0_14, %c0_15, %c0_16], %41 {strides = array<i32>} : memref<1x1x128xf32, #tpu.memory_space<vmem>>, vector<1x1x128xf32>,
    return
  }
  func.func @transform_0(%arg0: i32) -> (i32, i32) {
    %c0_i32 = arith.constant 0 : i32
    %c0_i32_0 = arith.constant 0 : i32
    return %arg0, %c0_i32 : i32, i32
  }
  func.func @transform_1(%arg0: i32) -> (i32, i32) {
    %c0_i32 = arith.constant 0 : i32
    %c0_i32_0 = arith.constant 0 : i32
    return %arg0, %c0_i32 : i32, i32
  }
  func.func @transform_2(%arg0: i32) -> (i32, i32, i32) {
    %c0_i32 = arith.constant 0 : i32
    %c0_i32_0 = arith.constant 0 : i32
    %c0_i32_1 = arith.constant 0 : i32
    return %arg0, %c0_i32, %c0_i32_0 : i32, i32, i32
  }
}

</mosaic_0001>

<llo_original>
// kernel: focal_loss_sigmoid.1
$region0: #{focal_loss_sigmoid.1}
  #allocation0 [shape = 'u32[]', space=smem, size = 0x4, offset = 0x4, fixed_abs, tag = 'smem constant byte address 0x4 - core index']
  #allocation1 [shape = 'u32[144,128]{1,0:T(1,128)}', space=vmem, size = 0x12000, scoped, tag = 'internal scratch']
  %s0 = inlined_call_operand.vmem [shape: f32[16,128], index: 0, kind: input, shape index: {}]
  %s1 = inlined_call_operand.vmem [shape: f32[16,128], index: 1, kind: input, shape index: {}]
  %s2 = inlined_call_operand.vmem [shape: f32[1,1,128], index: 2, kind: output, shape index: {}]
  %s3 = sld [smem:[#allocation0]]
  $region18: #{focal_loss_sigmoid.1} parent=0
    _
  %s5 = ssub.s32 1, %s3
  %s6 = scalar_select 0, %s5, %s3
  // Predicated region
  $region2: #{focal_loss_sigmoid.1} parent=0 // pred_check
    _
  $region3: #{focal_loss_sigmoid.1} parent=0 // pred_check_branch
    %8 = sbr.rel (0) target = $region5
  $region4: #{focal_loss_sigmoid.1} parent=0 // pred_region
    _
  $region5: #{focal_loss_sigmoid.1} parent=0 // pred_fallthru
    _
  // Predicated region
  $region6: #{focal_loss_sigmoid.1} parent=0 // pred_check
    _
  $region7: #{focal_loss_sigmoid.1} parent=0 // pred_check_branch
    %10 = sbr.rel (0) target = $region9
  $region8: #{focal_loss_sigmoid.1} parent=0 // pred_region
    _
  $region9: #{focal_loss_sigmoid.1} parent=0 // pred_fallthru
    _
  %v11 = vld [vmem:[%s0] sm:$0xff]
  %v12 = vld [vmem:[%s0 + $0x8] sm:$0xff]
  %v13 = vld [vmem:[%s1] sm:$0xff]
  %v14 = vld [vmem:[%s1 + $0x8] sm:$0xff]
  %v15 = vand.u32 2147483647, %v11
  %v16 = vand.u32 2147483647, %v12
  %v17 = vsub.f32 0.0, %v15
  %v18 = vsub.f32 0.0, %v16
  %v19 = vmul.f32 %v17, 1.442695
  %v20 = vpow.pop %v19
  %v21 = vmul.f32 %v18, 1.442695
  %v22 = vpow.pop %v21
  %v23 = vadd.f32 %v20, 1.0
  %v24 = vadd.f32 %v22, 1.0
  %v25 = vlog2.pop %v23
  %v26 = vmul.f32 %v25, 0.6931472
  %v27 = vlog2.pop %v24
  %v28 = vmul.f32 %v27, 0.6931472
  %v29 = vmin.f32 %v11, 0.0
  %v30 = vmin.f32 %v12, 0.0
  %v31 = vsub.f32 %v29, %v26
  %v32 = vsub.f32 %v30, %v28
  %v33 = vsub.f32 0.0, %v11
  %v34 = vsub.f32 0.0, %v12
  %v35 = vmin.f32 %v33, 0.0
  %v36 = vmin.f32 %v34, 0.0
  %v37 = vsub.f32 %v35, %v26
  %v38 = vsub.f32 %v36, %v28
  %v39 = vmul.f32 %v31, 1.442695
  %v40 = vpow.pop %v39
  %v41 = vmul.f32 %v32, 1.442695
  %v42 = vpow.pop %v41
  %v43 = vmul.f32 %v13, 0.25
  %v44 = vmul.f32 %v14, 0.25
  %v45 = vsub.f32 1.0, %v40
  %v46 = vsub.f32 1.0, %v42
  %v47 = vmul.f32 %v45, %v45
  %v48 = vmul.f32 %v46, %v46
  %v49 = vsub.f32 0.0, %v47
  %v50 = vsub.f32 0.0, %v48
  %v51 = vmul.f32 %v49, %v31
  %v52 = vmul.f32 %v50, %v32
  %v53 = vmul.f32 %v51, %v13
  %v54 = vmul.f32 %v52, %v14
  %v55 = vmul.f32 %v53, %v43
  %v56 = vmul.f32 %v54, %v44
  %v57 = vmul.f32 %v40, %v40
  %v58 = vmul.f32 %v42, %v42
  %v59 = vsub.f32 0.0, %v57
  %v60 = vsub.f32 0.0, %v58
  %v61 = vmul.f32 %v59, %v37
  %v62 = vmul.f32 %v60, %v38
  %v63 = vsub.f32 1.0, %v13
  %v64 = vsub.f32 1.0, %v14
  %v65 = vmul.f32 %v61, %v63
  %v66 = vmul.f32 %v62, %v64
  %v67 = vsub.f32 1.0, %v43
  %v68 = vsub.f32 1.0, %v44
  %v69 = vmul.f32 %v65, %v67
  %v70 = vmul.f32 %v66, %v68
  %v71 = vadd.f32 %v55, %v69
  %v72 = vadd.f32 %v56, %v70
  %v73 = vadd.f32 %v71, %v72
  %v74 = vrot.slane %v73, 4
  %v75 = vadd.f32 %v73, %v74
  %v76 = vrot.slane %v75, 2
  %v77 = vadd.f32 %v75, %v76
  %v78 = vrot.slane %v77, 1
  %v79 = vadd.f32 %v77, %v78
  %80 = vst [vmem:[%s2] sm:$0x1] %v79
  // Predicated region
  $region10: #{focal_loss_sigmoid.1} parent=0 // pred_check
    _
  $region11: #{focal_loss_sigmoid.1} parent=0 // pred_check_branch
    %82 = sbr.rel (0) target = $region13
  $region12: #{focal_loss_sigmoid.1} parent=0 // pred_region
    _
  $region13: #{focal_loss_sigmoid.1} parent=0 // pred_fallthru
    _
  // Predicated region
  $region14: #{focal_loss_sigmoid.1} parent=0 // pred_check
    _
  $region15: #{focal_loss_sigmoid.1} parent=0 // pred_check_branch
    %84 = sbr.rel (0) target = $region17
  $region16: #{focal_loss_sigmoid.1} parent=0 // pred_region
    _
  $region17: #{focal_loss_sigmoid.1} parent=0 // pred_fallthru
    _

</llo_original>
